<compile_context>
chip_gen: v7x
topology: tpu7x:2x2x1
jax: 0.10.0
libtpu: 0.0.40
codegen_flags: <defaults>
</compile_context>

<pallas_src>
import jax
import jax.numpy as jnp
from jax import lax
from jax.experimental import pallas as pl
from jax.experimental.pallas import tpu as pltpu

EPS = 1e-5                      # torch_geometric InstanceNorm default eps
VMEM_LIMIT_BYTES = 32 * 1024 * 1024


def _round_up(x, m):
    return ((x + m - 1) // m) * m


def _cost(flops, bytes_accessed, transcendentals=0):
    return pl.CostEstimate(flops=int(flops), transcendentals=int(transcendentals),
                           bytes_accessed=int(bytes_accessed))


# --------------------------------------------------------------------------
# Kernel 1: h1_pre = emb[col] @ W1a + emb[row] @ W1b + b1   (f12 never built)
#           stats1 += oneh^T @ [h1_pre, h1_pre^2]           ([G, 2*C1] accum)
# --------------------------------------------------------------------------
def _k1_linear1_stats(embc_ref, embr_ref, oneh_ref, w1a_ref, w1b_ref, b1_ref,
                      h1_ref, stats_ref):
    @pl.when(pl.program_id(0) == 0)
    def _init():
        stats_ref[...] = jnp.zeros_like(stats_ref)

    h = (jnp.dot(embc_ref[...], w1a_ref[...], preferred_element_type=jnp.float32)
         + jnp.dot(embr_ref[...], w1b_ref[...], preferred_element_type=jnp.float32)
         + b1_ref[...])                                           # [TE, C1] f32
    h1_ref[...] = h.astype(h1_ref.dtype)

    oneh = oneh_ref[...].astype(jnp.float32)                      # [TE, G]
    hh = jnp.concatenate([h, h * h], axis=-1)                     # [TE, 2*C1]
    stats_ref[...] += lax.dot_general(                            # [G, 2*C1]
        oneh, hh, dimension_numbers=(((0,), (0,)), ((), ())),
        preferred_element_type=jnp.float32)


# --------------------------------------------------------------------------
# Kernel 2: h1 = relu(norm(h1_pre)); h2_pre = h1 @ W2 + b2; stats2 accum
# --------------------------------------------------------------------------
def _k2_norm_relu_linear2_stats(h1_ref, oneh_ref, st1_ref, w2_ref, b2_ref,
                                h2_ref, stats_ref):
    @pl.when(pl.program_id(0) == 0)
    def _init():
        stats_ref[...] = jnp.zeros_like(stats_ref)

    c = h1_ref.shape[-1]
    h = h1_ref[...].astype(jnp.float32)                           # [TE, C1]
    oneh = oneh_ref[...].astype(jnp.float32)                      # [TE, G]
    st = st1_ref[...]                                             # [G, 2*C1] (already * 1/count)
    mean, ex2 = st[:, :c], st[:, c:]
    var = jnp.maximum(ex2 - mean * mean, 0.0)                     # guard cancellation
    inv_std = lax.rsqrt(var + EPS)                                # EUP rsqrt
    ss = jnp.concatenate([inv_std, -mean * inv_std], axis=-1)     # [G, 2*C1]
    ss_e = jnp.dot(oneh, ss, preferred_element_type=jnp.float32)  # one broadcast matmul
    hn = jnp.maximum(h * ss_e[:, :c] + ss_e[:, c:], 0.0)          # norm + ReLU (f32 VPU)

    h2 = (jnp.dot(hn.astype(jnp.bfloat16), w2_ref[...],
                  preferred_element_type=jnp.float32) + b2_ref[...])   # [TE, C2]
    h2_ref[...] = h2.astype(h2_ref.dtype)

    hh = jnp.concatenate([h2, h2 * h2], axis=-1)                  # [TE, 2*C2]
    stats_ref[...] += lax.dot_general(
        oneh, hh, dimension_numbers=(((0,), (0,)), ((), ())),
        preferred_element_type=jnp.float32)


# --------------------------------------------------------------------------
# Kernel 3: h2 = relu(norm(h2_pre)); out = h2 @ w3 + b3 (VPU reduce, no MXU)
# --------------------------------------------------------------------------
def _k3_norm_relu_linear3(h2_ref, oneh_ref, st2_ref, w3_ref, b3_ref, out_ref):
    c = h2_ref.shape[-1]
    h = h2_ref[...].astype(jnp.float32)                           # [TE, C2]
    oneh = oneh_ref[...].astype(jnp.float32)                      # [TE, G]
    st = st2_ref[...]                                             # [G, 2*C2]
    mean, ex2 = st[:, :c], st[:, c:]
    var = jnp.maximum(ex2 - mean * mean, 0.0)
    inv_std = lax.rsqrt(var + EPS)
    ss = jnp.concatenate([inv_std, -mean * inv_std], axis=-1)
    ss_e = jnp.dot(oneh, ss, preferred_element_type=jnp.float32)
    hn = jnp.maximum(h * ss_e[:, :c] + ss_e[:, c:], 0.0)

    # Final Linear(H -> 1): elementwise multiply + cross-lane reduce, plus
    # the SMEM scalar bias.
    out_ref[...] = (jnp.sum(hn * w3_ref[...], axis=-1, keepdims=True)
                    + b3_ref[0, 0])


# --------------------------------------------------------------------------
# Host wrapper
# --------------------------------------------------------------------------
def extractor_mlp_pallas(params, emb, edge_index, batch, num_graphs, tile_e=512):
    """learn_edge_att=True forward. emb:[N,H] f32, edge_index:[2,E] i32, batch:[N] i32."""
    w1, b1, w2, b2, w3, b3 = params
    H = emb.shape[1]
    C1 = w1.shape[1]      # 4H
    C2 = w2.shape[1]      # H
    G = int(num_graphs)

    col, row = edge_index[0], edge_index[1]
    E = int(col.shape[0])
    TE = min(tile_e, _round_up(max(E, 1), 256))
    E_pad = _round_up(max(E, 1), TE)
    n_tiles = E_pad // TE
    pad = E_pad - E

    # --- host glue: gather, pad, one-hot, dtype prep -----------------------
    # TODO(synk): the emb[col]/emb[row] gather could move in-kernel via
    # scalar-prefetched indices + pl.Element row gather; kept as JAX glue here.
    seg = batch[col]
    seg_p = jnp.pad(seg, (0, pad), constant_values=G)             # padded -> no graph
    oneh_b = (seg_p[:, None] == jnp.arange(G, dtype=jnp.int32)[None, :])
    counts = oneh_b.astype(jnp.float32).sum(axis=0)               # [G]
    invc = (1.0 / jnp.clip(counts, 1.0, None))[:, None]           # [G, 1]

    embc16 = jnp.pad(emb[col], ((0, pad), (0, 0))).astype(jnp.bfloat16)
    embr16 = jnp.pad(emb[row], ((0, pad), (0, 0))).astype(jnp.bfloat16)
    oneh16 = oneh_b.astype(jnp.bfloat16)                          # [E_pad, G]

    w1a16 = w1[:H].astype(jnp.bfloat16)                           # [H, C1]
    w1b16 = w1[H:].astype(jnp.bfloat16)                           # [H, C1]
    w2_16 = w2.astype(jnp.bfloat16)                               # [C1, C2]
    w3_row = jnp.reshape(w3, (1, C2)).astype(jnp.float32)         # [1, C2]
    b3_sc = jnp.reshape(b3, (1, 1)).astype(jnp.float32)           # SMEM scalar

    grid = (n_tiles,)
    edge_map = lambda i: (i, 0)
    fixed_map = lambda i: (0, 0)

    # ------------------------------ K1 -------------------------------------
    h1_pre, stats1 = pl.pallas_call(
        _k1_linear1_stats,
        grid=grid,
        in_specs=[
            pl.BlockSpec((TE, H), edge_map),
            pl.BlockSpec((TE, H), edge_map),
            pl.BlockSpec((TE, G), edge_map),
            pl.BlockSpec((H, C1), fixed_map),
            pl.BlockSpec((H, C1), fixed_map),
            pl.BlockSpec((1, C1), fixed_map),
        ],
        out_specs=(
            pl.BlockSpec((TE, C1), edge_map),
            pl.BlockSpec((G, 2 * C1), fixed_map),   # resident accumulator
        ),
        out_shape=(
            jax.ShapeDtypeStruct((E_pad, C1), jnp.bfloat16),
            jax.ShapeDtypeStruct((G, 2 * C1), jnp.float32),
        ),
        compiler_params=pltpu.CompilerParams(
            dimension_semantics=("arbitrary",),      # stats block is revisited
            vmem_limit_bytes=VMEM_LIMIT_BYTES),
        cost_estimate=_cost(
            flops=2 * E_pad * H * C1 * 2 + 2 * E_pad * G * 2 * C1,
            bytes_accessed=(2 * E_pad * H * 2 + E_pad * G * 2 + 2 * H * C1 * 2
                            + C1 * 4 + E_pad * C1 * 2 + G * 2 * C1 * 4)),
    )(embc16, embr16, oneh16, w1a16, w1b16, b1)

    stats1_scaled = stats1 * invc                    # [G, 2*C1]: mean | E[x^2]

    # ------------------------------ K2 -------------------------------------
    h2_pre, stats2 = pl.pallas_call(
        _k2_norm_relu_linear2_stats,
        grid=grid,
        in_specs=[
            pl.BlockSpec((TE, C1), edge_map),
            pl.BlockSpec((TE, G), edge_map),
            pl.BlockSpec((G, 2 * C1), fixed_map),
            pl.BlockSpec((C1, C2), fixed_map),
            pl.BlockSpec((1, C2), fixed_map),
        ],
        out_specs=(
            pl.BlockSpec((TE, C2), edge_map),
            pl.BlockSpec((G, 2 * C2), fixed_map),
        ),
        out_shape=(
            jax.ShapeDtypeStruct((E_pad, C2), jnp.bfloat16),
            jax.ShapeDtypeStruct((G, 2 * C2), jnp.float32),
        ),
        compiler_params=pltpu.CompilerParams(
            dimension_semantics=("arbitrary",),
            vmem_limit_bytes=VMEM_LIMIT_BYTES),
        cost_estimate=_cost(
            flops=(2 * E_pad * G * 2 * C1 + 2 * E_pad * C1 * C2
                   + 2 * E_pad * G * 2 * C2),
            transcendentals=G * C1,
            bytes_accessed=(E_pad * C1 * 2 + E_pad * G * 2 + G * 2 * C1 * 4
                            + C1 * C2 * 2 + C2 * 4 + E_pad * C2 * 2
                            + G * 2 * C2 * 4)),
    )(h1_pre, oneh16, stats1_scaled, w2_16, b2)

    stats2_scaled = stats2 * invc                    # [G, 2*C2]

    # ------------------------------ K3 -------------------------------------
    out = pl.pallas_call(
        _k3_norm_relu_linear3,
        grid=grid,
        in_specs=[
            pl.BlockSpec((TE, C2), edge_map),
            pl.BlockSpec((TE, G), edge_map),
            pl.BlockSpec((G, 2 * C2), fixed_map),
            pl.BlockSpec((1, C2), fixed_map),
            pl.BlockSpec(memory_space=pltpu.MemorySpace.SMEM),   # b3 scalar
        ],
        out_specs=pl.BlockSpec((TE, 1), edge_map),
        out_shape=jax.ShapeDtypeStruct((E_pad, 1), jnp.float32),
        compiler_params=pltpu.CompilerParams(
            dimension_semantics=("parallel",),       # independent E tiles
            vmem_limit_bytes=VMEM_LIMIT_BYTES),
        cost_estimate=_cost(
            flops=2 * E_pad * G * 2 * C2 + 2 * E_pad * C2,
            transcendentals=G * C2,
            bytes_accessed=(E_pad * C2 * 2 + E_pad * G * 2 + G * 2 * C2 * 4
                            + C2 * 4 + 4 + E_pad * 4)),
    )(h2_pre, oneh16, stats2_scaled, w3_row, b3_sc)

    return out[:E]


# --------------------------------------------------------------------------
# Pure-JAX reference (exact f32, centered two-pass variance) for correctness.
# --------------------------------------------------------------------------
def extractor_mlp_ref(params, emb, edge_index, batch, num_graphs):
    col, row = edge_index[0], edge_index[1]
    f12 = jnp.concatenate([emb[col], emb[row]], axis=-1)
    seg = batch[col]
    oneh = (seg[:, None] == jnp.arange(num_graphs)[None, :]).astype(jnp.float32)
    invc = (1.0 / jnp.clip(oneh.sum(0), 1.0, None))[:, None]

    def inorm(h):
        mean_g = (oneh.T @ h) * invc
        xc = h - oneh @ mean_g
        var_g = (oneh.T @ (xc * xc)) * invc
        return xc * (oneh @ (1.0 / jnp.sqrt(var_g + EPS)))

    w1, b1, w2, b2, w3, b3 = params
    h1 = jnp.maximum(inorm(f12 @ w1 + b1), 0.0)
    h2 = jnp.maximum(inorm(h1 @ w2 + b2), 0.0)
    return h2 @ w3 + b3


def init_params(key, hidden_size):
    """PyTorch-Linear-style deterministic init. Weights stored as [in, out]."""
    dims = [2 * hidden_size, 4 * hidden_size, hidden_size, 1]
    params = []
    keys = jax.random.split(key, 2 * (len(dims) - 1))
    for i in range(len(dims) - 1):
        fan_in, fan_out = dims[i], dims[i + 1]
        bound = 1.0 / (fan_in ** 0.5)
        w = jax.random.uniform(keys[2 * i], (fan_in, fan_out),
                               minval=-bound, maxval=bound, dtype=jnp.float32)
        b = jax.random.uniform(keys[2 * i + 1], (1, fan_out),
                               minval=-bound, maxval=bound, dtype=jnp.float32)
        params += [w, b]
    return tuple(params)


if __name__ == "__main__":
    hidden_size = 32
    num_nodes = 12
    num_edges = 24
    num_graphs = 3

    key = jax.random.PRNGKey(0)
    k_emb, k_col, k_row, k_par = jax.random.split(key, 4)

    emb = jax.random.normal(k_emb, (num_nodes, hidden_size), dtype=jnp.float32)
    col = jax.random.randint(k_col, (num_edges,), 0, num_nodes, dtype=jnp.int32)
    row = jax.random.randint(k_row, (num_edges,), 0, num_nodes, dtype=jnp.int32)
    edge_index = jnp.stack([col, row], axis=0)                     # [2, E]
    batch = jnp.repeat(jnp.arange(num_graphs, dtype=jnp.int32),
                       num_nodes // num_graphs)                    # [N]

    params = init_params(k_par, hidden_size)

    out = extractor_mlp_pallas(params, emb, edge_index, batch, num_graphs)
    out = jax.block_until_ready(out)

    ref = extractor_mlp_ref(params, emb, edge_index, batch, num_graphs)
    assert out.shape == (num_edges, 1)
    # Loosened tolerance: hidden-layer matmuls and E-sized intermediates are
    # bf16 (reference is pure f32).
    assert jnp.allclose(out, ref, rtol=5e-2, atol=5e-2), \
        float(jnp.max(jnp.abs(out - ref)))

    # TODO(synk): training-mode Dropout(p=0.5) and InstanceNorm running-stat
    # updates are not modeled (eval-mode forward only).
    print("KERNEL_OK")
</pallas_src>

<mosaic_0001>
module attributes {stable_mosaic.version = 11 : i64} {
  func.func @_k1_linear1_stats(%arg0: i32, %arg1: memref<256x32xbf16, #tpu.memory_space<vmem>>, %arg2: memref<256x32xbf16, #tpu.memory_space<vmem>>, %arg3: memref<256x3xbf16, #tpu.memory_space<vmem>>, %arg4: memref<32x128xbf16, #tpu.memory_space<vmem>>, %arg5: memref<32x128xbf16, #tpu.memory_space<vmem>>, %arg6: memref<1x128xf32, #tpu.memory_space<vmem>>, %arg7: memref<256x128xbf16, #tpu.memory_space<vmem>>, %arg8: memref<3x256xf32, #tpu.memory_space<vmem>>) attributes {dimension_semantics = [#tpu.dimension_semantics<arbitrary>], iteration_bounds = array<i64: 1>, scalar_prefetch = 0 : i64, scratch_operands = 0 : i64, tpu.core_type = #tpu.core_type<tc>, window_params = [{transform_indices = @transform_0, window_bounds = array<i64: 256, 32>}, {transform_indices = @transform_1, window_bounds = array<i64: 256, 32>}, {transform_indices = @transform_2, window_bounds = array<i64: 256, 3>}, {pipeline_mode = #tpu.pipeline_mode<synchronous>, transform_indices = @transform_3, window_bounds = array<i64: 32, 128>}, {pipeline_mode = #tpu.pipeline_mode<synchronous>, transform_indices = @transform_4, window_bounds = array<i64: 32, 128>}, {pipeline_mode = #tpu.pipeline_mode<synchronous>, transform_indices = @transform_5, window_bounds = array<i64: 1, 128>}, {transform_indices = @transform_6, window_bounds = array<i64: 256, 128>}, {pipeline_mode = #tpu.pipeline_mode<synchronous>, transform_indices = @transform_7, window_bounds = array<i64: 3, 256>}]} {
    %c0_i32 = arith.constant 0 : i32
    %0 = arith.cmpi eq, %arg0, %c0_i32 : i32
    %1 = arith.extui %0 : i1 to i32
    %c0_i32_0 = arith.constant 0 : i32
    %2 = arith.cmpi ne, %1, %c0_i32_0 : i32
    scf.if %2 {
      %cst_20 = arith.constant 0.000000e+00 : f32
      %23 = vector.broadcast %cst_20 : f32 to vector<3x256xf32>
      %c0_21 = arith.constant 0 : index
      %c0_22 = arith.constant 0 : index
      %24 = vector.load %arg8[%c0_21, %c0_22] : memref<3x256xf32, #tpu.memory_space<vmem>>, vector<3x256xf32>
      tpu.vector_store %arg8[%c0_21, %c0_22], %23 {strides = array<i32>} : memref<3x256xf32, #tpu.memory_space<vmem>>, vector<3x256xf32>,
    } else {
    }
    %c0 = arith.constant 0 : index
    %c0_1 = arith.constant 0 : index
    %3 = vector.load %arg1[%c0, %c0_1] : memref<256x32xbf16, #tpu.memory_space<vmem>>, vector<256x32xbf16>
    %c0_2 = arith.constant 0 : index
    %c0_3 = arith.constant 0 : index
    %4 = vector.load %arg4[%c0_2, %c0_3] : memref<32x128xbf16, #tpu.memory_space<vmem>>, vector<32x128xbf16>
    %cst = arith.constant dense<0.000000e+00> : vector<256x128xf32>
    %5 = tpu.matmul %3, %4, %cst {dimension_numbers = #tpu.dot_dimension_numbers<[1], [0], [0], [1], [0, 0, 1, 1], [], []>} : vector<256x32xbf16>, vector<32x128xbf16>, vector<256x128xf32> -> vector<256x128xf32>
    %c0_4 = arith.constant 0 : index
    %c0_5 = arith.constant 0 : index
    %6 = vector.load %arg2[%c0_4, %c0_5] : memref<256x32xbf16, #tpu.memory_space<vmem>>, vector<256x32xbf16>
    %c0_6 = arith.constant 0 : index
    %c0_7 = arith.constant 0 : index
    %7 = vector.load %arg5[%c0_6, %c0_7] : memref<32x128xbf16, #tpu.memory_space<vmem>>, vector<32x128xbf16>
    %cst_8 = arith.constant dense<0.000000e+00> : vector<256x128xf32>
    %8 = tpu.matmul %6, %7, %cst_8 {dimension_numbers = #tpu.dot_dimension_numbers<[1], [0], [0], [1], [0, 0, 1, 1], [], []>} : vector<256x32xbf16>, vector<32x128xbf16>, vector<256x128xf32> -> vector<256x128xf32>
    %9 = arith.addf %5, %8 : vector<256x128xf32>
    %c0_9 = arith.constant 0 : index
    %c0_10 = arith.constant 0 : index
    %10 = vector.load %arg6[%c0_9, %c0_10] : memref<1x128xf32, #tpu.memory_space<vmem>>, vector<1x128xf32>
    %11 = vector.broadcast %10 : vector<1x128xf32> to vector<256x128xf32>
    %12 = arith.addf %9, %11 : vector<256x128xf32>
    %13 = arith.truncf %12 : vector<256x128xf32> to vector<256x128xbf16>
    %c0_11 = arith.constant 0 : index
    %c0_12 = arith.constant 0 : index
    %14 = vector.load %arg7[%c0_11, %c0_12] : memref<256x128xbf16, #tpu.memory_space<vmem>>, vector<256x128xbf16>
    tpu.vector_store %arg7[%c0_11, %c0_12], %13 {strides = array<i32>} : memref<256x128xbf16, #tpu.memory_space<vmem>>, vector<256x128xbf16>,
    %c0_13 = arith.constant 0 : index
    %c0_14 = arith.constant 0 : index
    %15 = vector.load %arg3[%c0_13, %c0_14] : memref<256x3xbf16, #tpu.memory_space<vmem>>, vector<256x3xbf16>
    %16 = arith.extf %15 : vector<256x3xbf16> to vector<256x3xf32>
    %17 = arith.mulf %12, %12 : vector<256x128xf32>
    %18 = tpu.concatenate %12, %17 in 1 : vector<256x128xf32>, vector<256x128xf32> -> vector<256x256xf32>
    %c0_15 = arith.constant 0 : index
    %c0_16 = arith.constant 0 : index
    %19 = vector.load %arg8[%c0_15, %c0_16] : memref<3x256xf32, #tpu.memory_space<vmem>>, vector<3x256xf32>
    %cst_17 = arith.constant dense<0.000000e+00> : vector<3x256xf32>
    %20 = tpu.matmul %16, %18, %cst_17 {dimension_numbers = #tpu.dot_dimension_numbers<[0], [0], [1], [1], [0, 1, 1, 1], [], []>} : vector<256x3xf32>, vector<256x256xf32>, vector<3x256xf32> -> vector<3x256xf32>
    %21 = arith.addf %19, %20 : vector<3x256xf32>
    %c0_18 = arith.constant 0 : index
    %c0_19 = arith.constant 0 : index
    %22 = vector.load %arg8[%c0_18, %c0_19] : memref<3x256xf32, #tpu.memory_space<vmem>>, vector<3x256xf32>
    tpu.vector_store %arg8[%c0_18, %c0_19], %21 {strides = array<i32>} : memref<3x256xf32, #tpu.memory_space<vmem>>, vector<3x256xf32>,
    return
  }
  func.func @transform_0(%arg0: i32) -> (i32, i32) {
    %c0_i32 = arith.constant 0 : i32
    %c0_i32_0 = arith.constant 0 : i32
    return %arg0, %c0_i32 : i32, i32
  }
  func.func @transform_1(%arg0: i32) -> (i32, i32) {
    %c0_i32 = arith.constant 0 : i32
    %c0_i32_0 = arith.constant 0 : i32
    return %arg0, %c0_i32 : i32, i32
  }
  func.func @transform_2(%arg0: i32) -> (i32, i32) {
    %c0_i32 = arith.constant 0 : i32
    %c0_i32_0 = arith.constant 0 : i32
    return %arg0, %c0_i32 : i32, i32
  }
  func.func @transform_3(%arg0: i32) -> (i32, i32) {
    %c0_i32 = arith.constant 0 : i32
    %c0_i32_0 = arith.constant 0 : i32
    %c0_i32_1 = arith.constant 0 : i32
    return %c0_i32, %c0_i32_0 : i32, i32
  }
  func.func @transform_4(%arg0: i32) -> (i32, i32) {
    %c0_i32 = arith.constant 0 : i32
    %c0_i32_0 = arith.constant 0 : i32
    %c0_i32_1 = arith.constant 0 : i32
    return %c0_i32, %c0_i32_0 : i32, i32
  }
  func.func @transform_5(%arg0: i32) -> (i32, i32) {
    %c0_i32 = arith.constant 0 : i32
    %c0_i32_0 = arith.constant 0 : i32
    %c0_i32_1 = arith.constant 0 : i32
    return %c0_i32, %c0_i32_0 : i32, i32
  }
  func.func @transform_6(%arg0: i32) -> (i32, i32) {
    %c0_i32 = arith.constant 0 : i32
    %c0_i32_0 = arith.constant 0 : i32
    return %arg0, %c0_i32 : i32, i32
  }
  func.func @transform_7(%arg0: i32) -> (i32, i32) {
    %c0_i32 = arith.constant 0 : i32
    %c0_i32_0 = arith.constant 0 : i32
    %c0_i32_1 = arith.constant 0 : i32
    return %c0_i32, %c0_i32_0 : i32, i32
  }
}

</mosaic_0001>

<llo_original>
// kernel: tpu_custom_call.1
$region0: #{tpu_custom_call.1}
  #allocation0 [shape = 'u32[]', space=smem, size = 0x4, offset = 0x4, fixed_abs, tag = 'smem constant byte address 0x4 - core index']
  #allocation1 [shape = 'u32[144,128]{1,0:T(1,128)}', space=vmem, size = 0x12000, scoped, tag = 'internal scratch']
  %s0 = inlined_call_operand.vmem [shape: bf16[256,32], index: 0, kind: input, shape index: {}]
  %s1 = inlined_call_operand.vmem [shape: bf16[256,32], index: 1, kind: input, shape index: {}]
  %s2 = inlined_call_operand.vmem [shape: bf16[256,3], index: 2, kind: input, shape index: {}]
  %s3 = inlined_call_operand.vmem [shape: bf16[32,128], index: 3, kind: input, shape index: {}]
  %s4 = inlined_call_operand.vmem [shape: bf16[32,128], index: 4, kind: input, shape index: {}]
  %s5 = inlined_call_operand.vmem [shape: f32[1,128], index: 5, kind: input, shape index: {}]
  %s6 = inlined_call_operand.hbm [shape: bf16[256,128], index: 6, kind: output, shape index: {0}]
  %s7 = inlined_call_operand.hbm [shape: f32[3,256], index: 7, kind: output, shape index: {1}]
  %8 = xla_tuple %s6, %s7
  %s9 = sld [smem:[#allocation0]]
  $region46: #{tpu_custom_call.1} parent=0
    _
  %s11 = ssub.s32 1, %s9
  %s12 = scalar_select 0, %s11, %s9
  $region1: #{tpu_custom_call.1} parent=0
    #allocation2 [shape = 'u8[65536]{0}', space=vmem, size = 0x10000, scoped, tag = 'output window, operand 0, single buffered']
    #allocation3 [shape = 's32[1]{0}', space=sflag, size = 0x4, scoped, tag = 'scoped memory for tpu_custom_call.1']
    #allocation4 [shape = 'u8[4096]{0}', space=vmem, size = 0x1000, scoped, tag = 'output window, operand 1, single buffered']
    #allocation5 [shape = 's32[1]{0}', space=sflag, size = 0x4, scoped, tag = 'scoped memory for tpu_custom_call.1']
    %13 = vsyncpa [#allocation3], 0
    %14 = vsyncpa [#allocation5], 0
    // Predicated region
    $region2: #{tpu_custom_call.1} parent=1 // pred_check
      _
    $region3: #{tpu_custom_call.1} parent=1 // pred_check_branch
      %16 = sbr.rel (0) target = $region5
    $region4: #{tpu_custom_call.1} parent=1 // pred_region
      _
    $region5: #{tpu_custom_call.1} parent=1 // pred_fallthru
      _
    // Predicated region
    $region6: #{tpu_custom_call.1} parent=1 // pred_check
      _
    $region7: #{tpu_custom_call.1} parent=1 // pred_check_branch
      %18 = sbr.rel (0) target = $region9
    $region8: #{tpu_custom_call.1} parent=1 // pred_region
      _
    $region9: #{tpu_custom_call.1} parent=1 // pred_fallthru
      _
    // Predicated region
    $region10: #{tpu_custom_call.1} parent=1 // pred_check
      _
    $region11: #{tpu_custom_call.1} parent=1 // pred_check_branch
      %20 = sbr.rel (0) target = $region13
    $region12: #{tpu_custom_call.1} parent=1 // pred_region
      _
    $region13: #{tpu_custom_call.1} parent=1 // pred_fallthru
      _
    // Predicated region
    $region14: #{tpu_custom_call.1} parent=1 // pred_check
      _
    $region15: #{tpu_custom_call.1} parent=1 // pred_check_branch
      %22 = sbr.rel (0) target = $region17
    $region16: #{tpu_custom_call.1} parent=1 // pred_region
      _
    $region17: #{tpu_custom_call.1} parent=1 // pred_fallthru
      _
    // Predicated region
    $region18: #{tpu_custom_call.1} parent=1 // pred_check
      _
    $region19: #{tpu_custom_call.1} parent=1 // pred_check_branch
      %24 = sbr.rel (0) target = $region21
    $region20: #{tpu_custom_call.1} parent=1 // pred_region
      _
    $region21: #{tpu_custom_call.1} parent=1 // pred_fallthru
      _
    // Predicated region
    $region22: #{tpu_custom_call.1} parent=1 // pred_check
      _
    $region23: #{tpu_custom_call.1} parent=1 // pred_check_branch
      %26 = sbr.rel (0) target = $region25
    $region24: #{tpu_custom_call.1} parent=1 // pred_region
      _
    $region25: #{tpu_custom_call.1} parent=1 // pred_fallthru
      _
    %p28 = scmp.eq.s32.totalorder 0, 0
    // Predicated region
    $region26: #{tpu_custom_call.1} parent=1 // pred_check
      %p29 = pneg %p28
    $region27: #{tpu_custom_call.1} parent=1 // pred_check_branch
      %31 = sbr.rel (%p29) target = $region29
    $region28: #{tpu_custom_call.1} parent=1 // pred_region
      %32 = vst [vmem:[#allocation4] sm:$0x77] 0.0
    $region29: #{tpu_custom_call.1} parent=1 // pred_fallthru
      _
    %v33 = vld [vmem:[%s0] sm:$0xf]
    %v34 = vld [vmem:[%s0 + $0x4] sm:$0xf]
    %v35 = vld [vmem:[%s0 + $0x8] sm:$0xf]
    %v36 = vld [vmem:[%s0 + $0xc] sm:$0xf]
    %v37 = vld [vmem:[%s0 + $0x10] sm:$0xf]
    %v38 = vld [vmem:[%s0 + $0x14] sm:$0xf]
    %v39 = vld [vmem:[%s0 + $0x18] sm:$0xf]
    %v40 = vld [vmem:[%s0 + $0x1c] sm:$0xf]
    %v41 = vld [vmem:[%s0 + $0x20] sm:$0xf]
    %v42 = vld [vmem:[%s0 + $0x24] sm:$0xf]
    %v43 = vld [vmem:[%s0 + $0x28] sm:$0xf]
    %v44 = vld [vmem:[%s0 + $0x2c] sm:$0xf]
    %v45 = vld [vmem:[%s0 + $0x30] sm:$0xf]
    %v46 = vld [vmem:[%s0 + $0x34] sm:$0xf]
    %v47 = vld [vmem:[%s0 + $0x38] sm:$0xf]
    %v48 = vld [vmem:[%s0 + $0x3c] sm:$0xf]
    %v49 = vld [vmem:[%s0 + $0x40] sm:$0xf]
    %v50 = vld [vmem:[%s0 + $0x44] sm:$0xf]
    %v51 = vld [vmem:[%s0 + $0x48] sm:$0xf]
    %v52 = vld [vmem:[%s0 + $0x4c] sm:$0xf]
    %v53 = vld [vmem:[%s0 + $0x50] sm:$0xf]
    %v54 = vld [vmem:[%s0 + $0x54] sm:$0xf]
    %v55 = vld [vmem:[%s0 + $0x58] sm:$0xf]
    %v56 = vld [vmem:[%s0 + $0x5c] sm:$0xf]
    %v57 = vld [vmem:[%s0 + $0x60] sm:$0xf]
    %v58 = vld [vmem:[%s0 + $0x64] sm:$0xf]
    %v59 = vld [vmem:[%s0 + $0x68] sm:$0xf]
    %v60 = vld [vmem:[%s0 + $0x6c] sm:$0xf]
    %v61 = vld [vmem:[%s0 + $0x70] sm:$0xf]
    %v62 = vld [vmem:[%s0 + $0x74] sm:$0xf]
    %v63 = vld [vmem:[%s0 + $0x78] sm:$0xf]
    %v64 = vld [vmem:[%s0 + $0x7c] sm:$0xf]
    %v65 = vld [vmem:[%s3] sm:$0xf]
    %v66 = vld [vmem:[%s3 + $0x4] sm:$0xf]
    %v67 = vld [vmem:[%s3 + $0x8] sm:$0xf]
    %v68 = vld [vmem:[%s3 + $0xc] sm:$0xf]
    %v69 = vld [vmem:[%s1] sm:$0xf]
    %v70 = vld [vmem:[%s1 + $0x4] sm:$0xf]
    %v71 = vld [vmem:[%s1 + $0x8] sm:$0xf]
    %v72 = vld [vmem:[%s1 + $0xc] sm:$0xf]
    %v73 = vld [vmem:[%s1 + $0x10] sm:$0xf]
    %v74 = vld [vmem:[%s1 + $0x14] sm:$0xf]
    %v75 = vld [vmem:[%s1 + $0x18] sm:$0xf]
    %v76 = vld [vmem:[%s1 + $0x1c] sm:$0xf]
    %v77 = vld [vmem:[%s1 + $0x20] sm:$0xf]
    %v78 = vld [vmem:[%s1 + $0x24] sm:$0xf]
    %v79 = vld [vmem:[%s1 + $0x28] sm:$0xf]
    %v80 = vld [vmem:[%s1 + $0x2c] sm:$0xf]
    %v81 = vld [vmem:[%s1 + $0x30] sm:$0xf]
    %v82 = vld [vmem:[%s1 + $0x34] sm:$0xf]
    %v83 = vld [vmem:[%s1 + $0x38] sm:$0xf]
    %v84 = vld [vmem:[%s1 + $0x3c] sm:$0xf]
    %v85 = vld [vmem:[%s1 + $0x40] sm:$0xf]
    %v86 = vld [vmem:[%s1 + $0x44] sm:$0xf]
    %v87 = vld [vmem:[%s1 + $0x48] sm:$0xf]
    %v88 = vld [vmem:[%s1 + $0x4c] sm:$0xf]
    %v89 = vld [vmem:[%s1 + $0x50] sm:$0xf]
    %v90 = vld [vmem:[%s1 + $0x54] sm:$0xf]
    %v91 = vld [vmem:[%s1 + $0x58] sm:$0xf]
    %v92 = vld [vmem:[%s1 + $0x5c] sm:$0xf]
    %v93 = vld [vmem:[%s1 + $0x60] sm:$0xf]
    %v94 = vld [vmem:[%s1 + $0x64] sm:$0xf]
    %v95 = vld [vmem:[%s1 + $0x68] sm:$0xf]
    %v96 = vld [vmem:[%s1 + $0x6c] sm:$0xf]
    %v97 = vld [vmem:[%s1 + $0x70] sm:$0xf]
    %v98 = vld [vmem:[%s1 + $0x74] sm:$0xf]
    %v99 = vld [vmem:[%s1 + $0x78] sm:$0xf]
    %v100 = vld [vmem:[%s1 + $0x7c] sm:$0xf]
    %v101 = vld [vmem:[%s4] sm:$0xf]
    %v102 = vld [vmem:[%s4 + $0x4] sm:$0xf]
    %v103 = vld [vmem:[%s4 + $0x8] sm:$0xf]
    %v104 = vld [vmem:[%s4 + $0xc] sm:$0xf]
    %v137 = vunpack.c.l.b16 %v69
    %v138 = vunpack.c.l.b16 %v70
    %v139 = vunpack.c.l.b16 %v71
    %v140 = vunpack.c.l.b16 %v72
    %v141 = vunpack.c.l.b16 %v73
    %v142 = vunpack.c.l.b16 %v74
    %v143 = vunpack.c.l.b16 %v75
    %v144 = vunpack.c.l.b16 %v76
    %v145 = vunpack.c.l.b16 %v77
    %v146 = vunpack.c.l.b16 %v78
    %v147 = vunpack.c.l.b16 %v79
    %v148 = vunpack.c.l.b16 %v80
    %v149 = vunpack.c.l.b16 %v81
    %v150 = vunpack.c.l.b16 %v82
    %v151 = vunpack.c.l.b16 %v83
    %v152 = vunpack.c.l.b16 %v84
    %v153 = vunpack.c.l.b16 %v85
    %v154 = vunpack.c.l.b16 %v86
    %v155 = vunpack.c.l.b16 %v87
    %v156 = vunpack.c.l.b16 %v88
    %v157 = vunpack.c.l.b16 %v89
    %v158 = vunpack.c.l.b16 %v90
    %v159 = vunpack.c.l.b16 %v91
    %v160 = vunpack.c.l.b16 %v92
    %v161 = vunpack.c.l.b16 %v93
    %v162 = vunpack.c.l.b16 %v94
    %v163 = vunpack.c.l.b16 %v95
    %v164 = vunpack.c.l.b16 %v96
    %v165 = vunpack.c.l.b16 %v97
    %v166 = vunpack.c.l.b16 %v98
    %v167 = vunpack.c.l.b16 %v99
    %v168 = vunpack.c.l.b16 %v100
    %v169 = vpack.c.b16 %v138, %v137
    %v170 = vpack.c.b16 %v140, %v139
    %v171 = vpack.c.b16 %v142, %v141
    %v172 = vpack.c.b16 %v144, %v143
    %v173 = vpack.c.b16 %v146, %v145
    %v174 = vpack.c.b16 %v148, %v147
    %v175 = vpack.c.b16 %v150, %v149
    %v176 = vpack.c.b16 %v152, %v151
    %v177 = vpack.c.b16 %v154, %v153
    %v178 = vpack.c.b16 %v156, %v155
    %v179 = vpack.c.b16 %v158, %v157
    %v180 = vpack.c.b16 %v160, %v159
    %v181 = vpack.c.b16 %v162, %v161
    %v182 = vpack.c.b16 %v164, %v163
    %v183 = vpack.c.b16 %v166, %v165
    %v184 = vpack.c.b16 %v168, %v167
    %v189 = vunpack.c.l.b16 %v101
    %v190 = vunpack.c.l.b16 %v102
    %v191 = vunpack.c.l.b16 %v103
    %v192 = vunpack.c.l.b16 %v104
    %v193 = vpack.c.b16 %v190, %v189
    %v194 = vpack.c.b16 %v192, %v191
    %vm197 = vcmask 261120
    %v199 = vsel %vm197, %v169, 0
    %v202 = vsel %vm197, %v170, 0
    %v205 = vsel %vm197, %v171, 0
    %v208 = vsel %vm197, %v172, 0
    %v211 = vsel %vm197, %v173, 0
    %v214 = vsel %vm197, %v174, 0
    %v217 = vsel %vm197, %v175, 0
    %v220 = vsel %vm197, %v176, 0
    %v223 = vsel %vm197, %v177, 0
    %v226 = vsel %vm197, %v178, 0
    %v229 = vsel %vm197, %v179, 0
    %v232 = vsel %vm197, %v180, 0
    %v235 = vsel %vm197, %v181, 0
    %v238 = vsel %vm197, %v182, 0
    %v241 = vsel %vm197, %v183, 0
    %v244 = vsel %vm197, %v184, 0
    %246 = vmatprep.subr.bf16.mxu0 0
    %247 = vmatpush1.bf16.msra.mxu0 %v193
    %248 = vmatprep.subr.bf16.mxu0 0
    %249 = vmatpush1.bf16.msra.mxu0 %v194
    %250 = vmatprep.subr.bf16.mxu0 0
    %251 = vmatpush1.bf16.msra.mxu0 0
    %252 = vmatprep.subr.bf16.mxu0 0
    %253 = vmatpush1.bf16.msra.mxu0 0
    %254 = vmatprep.subr.bf16.mxu0 0
    %255 = vmatpush1.bf16.msra.mxu0 0
    %256 = vmatprep.subr.bf16.mxu0 0
    %257 = vmatpush1.bf16.msra.mxu0 0
    %258 = vmatprep.subr.bf16.mxu0 0
    %259 = vmatpush1.bf16.msra.mxu0 0
    %260 = vmatprep.subr.bf16.mxu0 0
    %261 = vmatpush1.bf16.msra.mxu0 0
    %262 = vmatprep.subr.bf16.mxu0 0
    %263 = vmatpush1.bf16.msra.mxu0 0
    %264 = vmatprep.subr.bf16.mxu0 0
    %265 = vmatpush1.bf16.msra.mxu0 0
    %266 = vmatprep.subr.bf16.mxu0 0
    %267 = vmatpush1.bf16.msra.mxu0 0
    %268 = vmatprep.subr.bf16.mxu0 0
    %269 = vmatpush1.bf16.msra.mxu0 0
    %270 = vmatprep.subr.bf16.mxu0 0
    %271 = vmatpush1.bf16.msra.mxu0 0
    %272 = vmatprep.subr.bf16.mxu0 0
    %273 = vmatpush1.bf16.msra.mxu0 0
    %274 = vmatprep.subr.bf16.mxu0 0
    %275 = vmatpush1.bf16.msra.mxu0 0
    %276 = vmatprep.subr.bf16.mxu0 0
    %277 = vmatpush1.bf16.msra.mxu0 0
    %278 = vmatprep.mubr.bf16.mxu0 0
    %279 = vmatmul.mubr.bf16.gmra.mrb[0].mxu0 %v199
    %v280 = vpop.f32.mrb[0].mxu0
    %v281 = vadd.f32 0.0, %v280
    %v282 = vpop.f32.mrb[0].mxu0
    %v283 = vpop.f32.mrb[0].mxu0
    %v284 = vadd.f32 0.0, %v283
    %v285 = vpop.f32.mrb[0].mxu0
    %286 = vmatprep.mubr.bf16.mxu0 0
    %287 = vmatmul.mubr.bf16.gmra.mrb[0].mxu0 %v202
    %v288 = vpop.f32.mrb[0].mxu0
    %v289 = vadd.f32 0.0, %v288
    %v290 = vpop.f32.mrb[0].mxu0
    %v291 = vpop.f32.mrb[0].mxu0
    %v292 = vadd.f32 0.0, %v291
    %v293 = vpop.f32.mrb[0].mxu0
    %294 = vmatprep.mubr.bf16.mxu0 0
    %295 = vmatmul.mubr.bf16.gmra.mrb[0].mxu0 %v205
    %v296 = vpop.f32.mrb[0].mxu0
    %v297 = vadd.f32 0.0, %v296
    %v298 = vpop.f32.mrb[0].mxu0
    %v299 = vpop.f32.mrb[0].mxu0
    %v300 = vadd.f32 0.0, %v299
    %v301 = vpop.f32.mrb[0].mxu0
    %302 = vmatprep.mubr.bf16.mxu0 0
    %303 = vmatmul.mubr.bf16.gmra.mrb[0].mxu0 %v208
    %v304 = vpop.f32.mrb[0].mxu0
    %v305 = vadd.f32 0.0, %v304
    %v306 = vpop.f32.mrb[0].mxu0
    %v307 = vpop.f32.mrb[0].mxu0
    %v308 = vadd.f32 0.0, %v307
    %v309 = vpop.f32.mrb[0].mxu0
    %310 = vmatprep.mubr.bf16.mxu0 0
    %311 = vmatmul.mubr.bf16.gmra.mrb[0].mxu0 %v211
    %v312 = vpop.f32.mrb[0].mxu0
    %v313 = vadd.f32 0.0, %v312
    %v314 = vpop.f32.mrb[0].mxu0
    %v315 = vpop.f32.mrb[0].mxu0
    %v316 = vadd.f32 0.0, %v315
    %v317 = vpop.f32.mrb[0].mxu0
    %318 = vmatprep.mubr.bf16.mxu0 0
    %319 = vmatmul.mubr.bf16.gmra.mrb[0].mxu0 %v214
    %v320 = vpop.f32.mrb[0].mxu0
    %v321 = vadd.f32 0.0, %v320
    %v322 = vpop.f32.mrb[0].mxu0
    %v323 = vpop.f32.mrb[0].mxu0
    %v324 = vadd.f32 0.0, %v323
    %v325 = vpop.f32.mrb[0].mxu0
    %326 = vmatprep.mubr.bf16.mxu0 0
    %327 = vmatmul.mubr.bf16.gmra.mrb[0].mxu0 %v217
    %v328 = vpop.f32.mrb[0].mxu0
    %v329 = vadd.f32 0.0, %v328
    %v330 = vpop.f32.mrb[0].mxu0
    %v331 = vpop.f32.mrb[0].mxu0
    %v332 = vadd.f32 0.0, %v331
    %v333 = vpop.f32.mrb[0].mxu0
    %334 = vmatprep.mubr.bf16.mxu0 0
    %335 = vmatmul.mubr.bf16.gmra.mrb[0].mxu0 %v220
    %v336 = vpop.f32.mrb[0].mxu0
    %v337 = vadd.f32 0.0, %v336
    %v338 = vpop.f32.mrb[0].mxu0
    %v339 = vpop.f32.mrb[0].mxu0
    %v340 = vadd.f32 0.0, %v339
    %v341 = vpop.f32.mrb[0].mxu0
    %342 = vmatprep.mubr.bf16.mxu0 0
    %343 = vmatmul.mubr.bf16.gmra.mrb[0].mxu0 %v223
    %v344 = vpop.f32.mrb[0].mxu0
    %v345 = vadd.f32 0.0, %v344
    %v346 = vpop.f32.mrb[0].mxu0
    %v347 = vpop.f32.mrb[0].mxu0
    %v348 = vadd.f32 0.0, %v347
    %v349 = vpop.f32.mrb[0].mxu0
    %350 = vmatprep.mubr.bf16.mxu0 0
    %351 = vmatmul.mubr.bf16.gmra.mrb[0].mxu0 %v226
    %v352 = vpop.f32.mrb[0].mxu0
    %v353 = vadd.f32 0.0, %v352
    %v354 = vpop.f32.mrb[0].mxu0
    %v355 = vpop.f32.mrb[0].mxu0
    %v356 = vadd.f32 0.0, %v355
    %v357 = vpop.f32.mrb[0].mxu0
    %358 = vmatprep.mubr.bf16.mxu0 0
    %359 = vmatmul.mubr.bf16.gmra.mrb[0].mxu0 %v229
    %v360 = vpop.f32.mrb[0].mxu0
    %v361 = vadd.f32 0.0, %v360
    %v362 = vpop.f32.mrb[0].mxu0
    %v363 = vpop.f32.mrb[0].mxu0
    %v364 = vadd.f32 0.0, %v363
    %v365 = vpop.f32.mrb[0].mxu0
    %366 = vmatprep.mubr.bf16.mxu0 0
    %367 = vmatmul.mubr.bf16.gmra.mrb[0].mxu0 %v232
    %v368 = vpop.f32.mrb[0].mxu0
    %v369 = vadd.f32 0.0, %v368
    %v370 = vpop.f32.mrb[0].mxu0
    %v371 = vpop.f32.mrb[0].mxu0
    %v372 = vadd.f32 0.0, %v371
    %v373 = vpop.f32.mrb[0].mxu0
    %374 = vmatprep.mubr.bf16.mxu0 0
    %375 = vmatmul.mubr.bf16.gmra.mrb[0].mxu0 %v235
    %v376 = vpop.f32.mrb[0].mxu0
    %v377 = vadd.f32 0.0, %v376
    %v378 = vpop.f32.mrb[0].mxu0
    %v379 = vpop.f32.mrb[0].mxu0
    %v380 = vadd.f32 0.0, %v379
    %v381 = vpop.f32.mrb[0].mxu0
    %382 = vmatprep.mubr.bf16.mxu0 0
    %383 = vmatmul.mubr.bf16.gmra.mrb[0].mxu0 %v238
    %v384 = vpop.f32.mrb[0].mxu0
    %v385 = vadd.f32 0.0, %v384
    %v386 = vpop.f32.mrb[0].mxu0
    %v387 = vpop.f32.mrb[0].mxu0
    %v388 = vadd.f32 0.0, %v387
    %v389 = vpop.f32.mrb[0].mxu0
    %390 = vmatprep.mubr.bf16.mxu0 0
    %391 = vmatmul.mubr.bf16.gmra.mrb[0].mxu0 %v241
    %v392 = vpop.f32.mrb[0].mxu0
    %v393 = vadd.f32 0.0, %v392
    %v394 = vpop.f32.mrb[0].mxu0
    %v395 = vpop.f32.mrb[0].mxu0
    %v396 = vadd.f32 0.0, %v395
    %v397 = vpop.f32.mrb[0].mxu0
    %398 = vmatprep.mubr.bf16.mxu0 0
    %399 = vmatmul.mubr.bf16.gmra.mrb[0].mxu0 %v244
    %v400 = vpop.f32.mrb[0].mxu0
    %v401 = vadd.f32 0.0, %v400
    %v402 = vpop.f32.mrb[0].mxu0
    %v403 = vpop.f32.mrb[0].mxu0
    %v404 = vadd.f32 0.0, %v403
    %v405 = vpop.f32.mrb[0].mxu0
    %406 = vdwg.mxu0
    %v439 = vunpack.c.l.b16 %v33
    %v440 = vunpack.c.l.b16 %v34
    %v441 = vunpack.c.l.b16 %v35
    %v442 = vunpack.c.l.b16 %v36
    %v443 = vunpack.c.l.b16 %v37
    %v444 = vunpack.c.l.b16 %v38
    %v445 = vunpack.c.l.b16 %v39
    %v446 = vunpack.c.l.b16 %v40
    %v447 = vunpack.c.l.b16 %v41
    %v448 = vunpack.c.l.b16 %v42
    %v449 = vunpack.c.l.b16 %v43
    %v450 = vunpack.c.l.b16 %v44
    %v451 = vunpack.c.l.b16 %v45
    %v452 = vunpack.c.l.b16 %v46
    %v453 = vunpack.c.l.b16 %v47
    %v454 = vunpack.c.l.b16 %v48
    %v455 = vunpack.c.l.b16 %v49
    %v456 = vunpack.c.l.b16 %v50
    %v457 = vunpack.c.l.b16 %v51
    %v458 = vunpack.c.l.b16 %v52
    %v459 = vunpack.c.l.b16 %v53
    %v460 = vunpack.c.l.b16 %v54
    %v461 = vunpack.c.l.b16 %v55
    %v462 = vunpack.c.l.b16 %v56
    %v463 = vunpack.c.l.b16 %v57
    %v464 = vunpack.c.l.b16 %v58
    %v465 = vunpack.c.l.b16 %v59
    %v466 = vunpack.c.l.b16 %v60
    %v467 = vunpack.c.l.b16 %v61
    %v468 = vunpack.c.l.b16 %v62
    %v469 = vunpack.c.l.b16 %v63
    %v470 = vunpack.c.l.b16 %v64
    %v471 = vpack.c.b16 %v440, %v439
    %v472 = vpack.c.b16 %v442, %v441
    %v473 = vpack.c.b16 %v444, %v443
    %v474 = vpack.c.b16 %v446, %v445
    %v475 = vpack.c.b16 %v448, %v447
    %v476 = vpack.c.b16 %v450, %v449
    %v477 = vpack.c.b16 %v452, %v451
    %v478 = vpack.c.b16 %v454, %v453
    %v479 = vpack.c.b16 %v456, %v455
    %v480 = vpack.c.b16 %v458, %v457
    %v481 = vpack.c.b16 %v460, %v459
    %v482 = vpack.c.b16 %v462, %v461
    %v483 = vpack.c.b16 %v464, %v463
    %v484 = vpack.c.b16 %v466, %v465
    %v485 = vpack.c.b16 %v468, %v467
    %v486 = vpack.c.b16 %v470, %v469
    %v491 = vunpack.c.l.b16 %v65
    %v492 = vunpack.c.l.b16 %v66
    %v493 = vunpack.c.l.b16 %v67
    %v494 = vunpack.c.l.b16 %v68
    %v495 = vpack.c.b16 %v492, %v491
    %v496 = vpack.c.b16 %v494, %v493
    %v500 = vsel %vm197, %v471, 0
    %v503 = vsel %vm197, %v472, 0
    %v506 = vsel %vm197, %v473, 0
    %v509 = vsel %vm197, %v474, 0
    %v512 = vsel %vm197, %v475, 0
    %v515 = vsel %vm197, %v476, 0
    %v518 = vsel %vm197, %v477, 0
    %v521 = vsel %vm197, %v478, 0
    %v524 = vsel %vm197, %v479, 0
    %v527 = vsel %vm197, %v480, 0
    %v530 = vsel %vm197, %v481, 0
    %v533 = vsel %vm197, %v482, 0
    %v536 = vsel %vm197, %v483, 0
    %v539 = vsel %vm197, %v484, 0
    %v542 = vsel %vm197, %v485, 0
    %v545 = vsel %vm197, %v486, 0
    %547 = vmatprep.subr.bf16.mxu0 0
    %548 = vmatpush1.bf16.msra.mxu0 %v495
    %549 = vmatprep.subr.bf16.mxu0 0
    %550 = vmatpush1.bf16.msra.mxu0 %v496
    %551 = vmatprep.subr.bf16.mxu0 0
    %552 = vmatpush1.bf16.msra.mxu0 0
    %553 = vmatprep.subr.bf16.mxu0 0
    %554 = vmatpush1.bf16.msra.mxu0 0
    %555 = vmatprep.subr.bf16.mxu0 0
    %556 = vmatpush1.bf16.msra.mxu0 0
    %557 = vmatprep.subr.bf16.mxu0 0
    %558 = vmatpush1.bf16.msra.mxu0 0
    %559 = vmatprep.subr.bf16.mxu0 0
    %560 = vmatpush1.bf16.msra.mxu0 0
    %561 = vmatprep.subr.bf16.mxu0 0
    %562 = vmatpush1.bf16.msra.mxu0 0
    %563 = vmatprep.subr.bf16.mxu0 0
    %564 = vmatpush1.bf16.msra.mxu0 0
    %565 = vmatprep.subr.bf16.mxu0 0
    %566 = vmatpush1.bf16.msra.mxu0 0
    %567 = vmatprep.subr.bf16.mxu0 0
    %568 = vmatpush1.bf16.msra.mxu0 0
    %569 = vmatprep.subr.bf16.mxu0 0
    %570 = vmatpush1.bf16.msra.mxu0 0
    %571 = vmatprep.subr.bf16.mxu0 0
    %572 = vmatpush1.bf16.msra.mxu0 0
    %573 = vmatprep.subr.bf16.mxu0 0
    %574 = vmatpush1.bf16.msra.mxu0 0
    %575 = vmatprep.subr.bf16.mxu0 0
    %576 = vmatpush1.bf16.msra.mxu0 0
    %577 = vmatprep.subr.bf16.mxu0 0
    %578 = vmatpush1.bf16.msra.mxu0 0
    %579 = vmatprep.mubr.bf16.mxu0 0
    %580 = vmatmul.mubr.bf16.gmra.mrb[0].mxu0 %v500
    %v581 = vpop.f32.mrb[0].mxu0
    %v582 = vadd.f32 %v281, %v581
    %v583 = vpop.f32.mrb[0].mxu0
    %v584 = vpop.f32.mrb[0].mxu0
    %v585 = vadd.f32 %v284, %v584
    %v586 = vpop.f32.mrb[0].mxu0
    %587 = vmatprep.mubr.bf16.mxu0 0
    %588 = vmatmul.mubr.bf16.gmra.mrb[0].mxu0 %v503
    %v589 = vpop.f32.mrb[0].mxu0
    %v590 = vadd.f32 %v289, %v589
    %v591 = vpop.f32.mrb[0].mxu0
    %v592 = vpop.f32.mrb[0].mxu0
    %v593 = vadd.f32 %v292, %v592
    %v594 = vpop.f32.mrb[0].mxu0
    %595 = vmatprep.mubr.bf16.mxu0 0
    %596 = vmatmul.mubr.bf16.gmra.mrb[0].mxu0 %v506
    %v597 = vpop.f32.mrb[0].mxu0
    %v598 = vadd.f32 %v297, %v597
    %v599 = vpop.f32.mrb[0].mxu0
    %v600 = vpop.f32.mrb[0].mxu0
    %v601 = vadd.f32 %v300, %v600
    %v602 = vpop.f32.mrb[0].mxu0
    %603 = vmatprep.mubr.bf16.mxu0 0
    %604 = vmatmul.mubr.bf16.gmra.mrb[0].mxu0 %v509
    %v605 = vpop.f32.mrb[0].mxu0
    %v606 = vadd.f32 %v305, %v605
    %v607 = vpop.f32.mrb[0].mxu0
    %v608 = vpop.f32.mrb[0].mxu0
    %v609 = vadd.f32 %v308, %v608
    %v610 = vpop.f32.mrb[0].mxu0
    %611 = vmatprep.mubr.bf16.mxu0 0
    %612 = vmatmul.mubr.bf16.gmra.mrb[0].mxu0 %v512
    %v613 = vpop.f32.mrb[0].mxu0
    %v614 = vadd.f32 %v313, %v613
    %v615 = vpop.f32.mrb[0].mxu0
    %v616 = vpop.f32.mrb[0].mxu0
    %v617 = vadd.f32 %v316, %v616
    %v618 = vpop.f32.mrb[0].mxu0
    %619 = vmatprep.mubr.bf16.mxu0 0
    %620 = vmatmul.mubr.bf16.gmra.mrb[0].mxu0 %v515
    %v621 = vpop.f32.mrb[0].mxu0
    %v622 = vadd.f32 %v321, %v621
    %v623 = vpop.f32.mrb[0].mxu0
    %v624 = vpop.f32.mrb[0].mxu0
    %v625 = vadd.f32 %v324, %v624
    %v626 = vpop.f32.mrb[0].mxu0
    %627 = vmatprep.mubr.bf16.mxu0 0
    %628 = vmatmul.mubr.bf16.gmra.mrb[0].mxu0 %v518
    %v629 = vpop.f32.mrb[0].mxu0
    %v630 = vadd.f32 %v329, %v629
    %v631 = vpop.f32.mrb[0].mxu0
    %v632 = vpop.f32.mrb[0].mxu0
    %v633 = vadd.f32 %v332, %v632
    %v634 = vpop.f32.mrb[0].mxu0
    %635 = vmatprep.mubr.bf16.mxu0 0
    %636 = vmatmul.mubr.bf16.gmra.mrb[0].mxu0 %v521
    %v637 = vpop.f32.mrb[0].mxu0
    %v638 = vadd.f32 %v337, %v637
    %v639 = vpop.f32.mrb[0].mxu0
    %v640 = vpop.f32.mrb[0].mxu0
    %v641 = vadd.f32 %v340, %v640
    %v642 = vpop.f32.mrb[0].mxu0
    %643 = vmatprep.mubr.bf16.mxu0 0
    %644 = vmatmul.mubr.bf16.gmra.mrb[0].mxu0 %v524
    %v645 = vpop.f32.mrb[0].mxu0
    %v646 = vadd.f32 %v345, %v645
    %v647 = vpop.f32.mrb[0].mxu0
    %v648 = vpop.f32.mrb[0].mxu0
    %v649 = vadd.f32 %v348, %v648
    %v650 = vpop.f32.mrb[0].mxu0
    %651 = vmatprep.mubr.bf16.mxu0 0
    %652 = vmatmul.mubr.bf16.gmra.mrb[0].mxu0 %v527
    %v653 = vpop.f32.mrb[0].mxu0
    %v654 = vadd.f32 %v353, %v653
    %v655 = vpop.f32.mrb[0].mxu0
    %v656 = vpop.f32.mrb[0].mxu0
    %v657 = vadd.f32 %v356, %v656
    %v658 = vpop.f32.mrb[0].mxu0
    %659 = vmatprep.mubr.bf16.mxu0 0
    %660 = vmatmul.mubr.bf16.gmra.mrb[0].mxu0 %v530
    %v661 = vpop.f32.mrb[0].mxu0
    %v662 = vadd.f32 %v361, %v661
    %v663 = vpop.f32.mrb[0].mxu0
    %v664 = vpop.f32.mrb[0].mxu0
    %v665 = vadd.f32 %v364, %v664
    %v666 = vpop.f32.mrb[0].mxu0
    %667 = vmatprep.mubr.bf16.mxu0 0
    %668 = vmatmul.mubr.bf16.gmra.mrb[0].mxu0 %v533
    %v669 = vpop.f32.mrb[0].mxu0
    %v670 = vadd.f32 %v369, %v669
    %v671 = vpop.f32.mrb[0].mxu0
    %v672 = vpop.f32.mrb[0].mxu0
    %v673 = vadd.f32 %v372, %v672
    %v674 = vpop.f32.mrb[0].mxu0
    %675 = vmatprep.mubr.bf16.mxu0 0
    %676 = vmatmul.mubr.bf16.gmra.mrb[0].mxu0 %v536
    %v677 = vpop.f32.mrb[0].mxu0
    %v678 = vadd.f32 %v377, %v677
    %v679 = vpop.f32.mrb[0].mxu0
    %v680 = vpop.f32.mrb[0].mxu0
    %v681 = vadd.f32 %v380, %v680
    %v682 = vpop.f32.mrb[0].mxu0
    %683 = vmatprep.mubr.bf16.mxu0 0
    %684 = vmatmul.mubr.bf16.gmra.mrb[0].mxu0 %v539
    %v685 = vpop.f32.mrb[0].mxu0
    %v686 = vadd.f32 %v385, %v685
    %v687 = vpop.f32.mrb[0].mxu0
    %v688 = vpop.f32.mrb[0].mxu0
    %v689 = vadd.f32 %v388, %v688
    %v690 = vpop.f32.mrb[0].mxu0
    %691 = vmatprep.mubr.bf16.mxu0 0
    %692 = vmatmul.mubr.bf16.gmra.mrb[0].mxu0 %v542
    %v693 = vpop.f32.mrb[0].mxu0
    %v694 = vadd.f32 %v393, %v693
    %v695 = vpop.f32.mrb[0].mxu0
    %v696 = vpop.f32.mrb[0].mxu0
    %v697 = vadd.f32 %v396, %v696
    %v698 = vpop.f32.mrb[0].mxu0
    %699 = vmatprep.mubr.bf16.mxu0 0
    %700 = vmatmul.mubr.bf16.gmra.mrb[0].mxu0 %v545
    %v701 = vpop.f32.mrb[0].mxu0
    %v702 = vadd.f32 %v401, %v701
    %v703 = vpop.f32.mrb[0].mxu0
    %v704 = vpop.f32.mrb[0].mxu0
    %v705 = vadd.f32 %v404, %v704
    %v706 = vpop.f32.mrb[0].mxu0
    %707 = vdwg.mxu0
    %v708 = vld [vmem:[%s5] sm:$0x1]
    %v710 = vlaneseq
    %v711 = vshrl.u32 %v710, 7
    %v712 = vsub.s32 0, %v711
    %v713 = vrot.slane %v708, %v712
    %v715 = vadd.f32 %v582, %v713
    %v716 = vadd.f32 %v585, %v713
    %v717 = vadd.f32 %v590, %v713
    %v718 = vadd.f32 %v593, %v713
    %v719 = vadd.f32 %v598, %v713
    %v720 = vadd.f32 %v601, %v713
    %v721 = vadd.f32 %v606, %v713
    %v722 = vadd.f32 %v609, %v713
    %v723 = vadd.f32 %v614, %v713
    %v724 = vadd.f32 %v617, %v713
    %v725 = vadd.f32 %v622, %v713
    %v726 = vadd.f32 %v625, %v713
    %v727 = vadd.f32 %v630, %v713
    %v728 = vadd.f32 %v633, %v713
    %v729 = vadd.f32 %v638, %v713
    %v730 = vadd.f32 %v641, %v713
    %v731 = vadd.f32 %v646, %v713
    %v732 = vadd.f32 %v649, %v713
    %v733 = vadd.f32 %v654, %v713
    %v734 = vadd.f32 %v657, %v713
    %v735 = vadd.f32 %v662, %v713
    %v736 = vadd.f32 %v665, %v713
    %v737 = vadd.f32 %v670, %v713
    %v738 = vadd.f32 %v673, %v713
    %v739 = vadd.f32 %v678, %v713
    %v740 = vadd.f32 %v681, %v713
    %v741 = vadd.f32 %v686, %v713
    %v742 = vadd.f32 %v689, %v713
    %v743 = vadd.f32 %v694, %v713
    %v744 = vadd.f32 %v697, %v713
    %v745 = vadd.f32 %v702, %v713
    %v746 = vadd.f32 %v705, %v713
    %v747 = vpack.c.bf16 %v716, %v715
    %v748 = vpack.c.bf16 %v718, %v717
    %v749 = vpack.c.bf16 %v720, %v719
    %v750 = vpack.c.bf16 %v722, %v721
    %v751 = vpack.c.bf16 %v724, %v723
    %v752 = vpack.c.bf16 %v726, %v725
    %v753 = vpack.c.bf16 %v728, %v727
    %v754 = vpack.c.bf16 %v730, %v729
    %v755 = vpack.c.bf16 %v732, %v731
    %v756 = vpack.c.bf16 %v734, %v733
    %v757 = vpack.c.bf16 %v736, %v735
    %v758 = vpack.c.bf16 %v738, %v737
    %v759 = vpack.c.bf16 %v740, %v739
    %v760 = vpack.c.bf16 %v742, %v741
    %v761 = vpack.c.bf16 %v744, %v743
    %v762 = vpack.c.bf16 %v746, %v745
    %v779 = vunpack.c.l.b16 %v747
    %v780 = vunpack.c.h.b16 %v747
    %v781 = vunpack.c.l.b16 %v748
    %v782 = vunpack.c.h.b16 %v748
    %v783 = vunpack.c.l.b16 %v749
    %v784 = vunpack.c.h.b16 %v749
    %v785 = vunpack.c.l.b16 %v750
    %v786 = vunpack.c.h.b16 %v750
    %v787 = vunpack.c.l.b16 %v751
    %v788 = vunpack.c.h.b16 %v751
    %v789 = vunpack.c.l.b16 %v752
    %v790 = vunpack.c.h.b16 %v752
    %v791 = vunpack.c.l.b16 %v753
    %v792 = vunpack.c.h.b16 %v753
    %v793 = vunpack.c.l.b16 %v754
    %v794 = vunpack.c.h.b16 %v754
    %v795 = vunpack.c.l.b16 %v755
    %v796 = vunpack.c.h.b16 %v755
    %v797 = vunpack.c.l.b16 %v756
    %v798 = vunpack.c.h.b16 %v756
    %v799 = vunpack.c.l.b16 %v757
    %v800 = vunpack.c.h.b16 %v757
    %v801 = vunpack.c.l.b16 %v758
    %v802 = vunpack.c.h.b16 %v758
    %v803 = vunpack.c.l.b16 %v759
    %v804 = vunpack.c.h.b16 %v759
    %v805 = vunpack.c.l.b16 %v760
    %v806 = vunpack.c.h.b16 %v760
    %v807 = vunpack.c.l.b16 %v761
    %v808 = vunpack.c.h.b16 %v761
    %v809 = vunpack.c.l.b16 %v762
    %v810 = vunpack.c.h.b16 %v762
    %v811 = vpack.c.b16 %v779, %v779
    %v812 = vpack.c.b16 %v780, %v780
    %v813 = vpack.c.b16 %v781, %v781
    %v814 = vpack.c.b16 %v782, %v782
    %v815 = vpack.c.b16 %v783, %v783
    %v816 = vpack.c.b16 %v784, %v784
    %v817 = vpack.c.b16 %v785, %v785
    %v818 = vpack.c.b16 %v786, %v786
    %v819 = vpack.c.b16 %v787, %v787
    %v820 = vpack.c.b16 %v788, %v788
    %v821 = vpack.c.b16 %v789, %v789
    %v822 = vpack.c.b16 %v790, %v790
    %v823 = vpack.c.b16 %v791, %v791
    %v824 = vpack.c.b16 %v792, %v792
    %v825 = vpack.c.b16 %v793, %v793
    %v826 = vpack.c.b16 %v794, %v794
    %v827 = vpack.c.b16 %v795, %v795
    %v828 = vpack.c.b16 %v796, %v796
    %v829 = vpack.c.b16 %v797, %v797
    %v830 = vpack.c.b16 %v798, %v798
    %v831 = vpack.c.b16 %v799, %v799
    %v832 = vpack.c.b16 %v800, %v800
    %v833 = vpack.c.b16 %v801, %v801
    %v834 = vpack.c.b16 %v802, %v802
    %v835 = vpack.c.b16 %v803, %v803
    %v836 = vpack.c.b16 %v804, %v804
    %v837 = vpack.c.b16 %v805, %v805
    %v838 = vpack.c.b16 %v806, %v806
    %v839 = vpack.c.b16 %v807, %v807
    %v840 = vpack.c.b16 %v808, %v808
    %v841 = vpack.c.b16 %v809, %v809
    %v842 = vpack.c.b16 %v810, %v810
    %875 = vst [vmem:[#allocation2] sm:$0xf] %v811
    %876 = vst [vmem:[#allocation2 + $0x4] sm:$0xf] %v812
    %877 = vst [vmem:[#allocation2 + $0x8] sm:$0xf] %v813
    %878 = vst [vmem:[#allocation2 + $0xc] sm:$0xf] %v814
    %879 = vst [vmem:[#allocation2 + $0x10] sm:$0xf] %v815
    %880 = vst [vmem:[#allocation2 + $0x14] sm:$0xf] %v816
    %881 = vst [vmem:[#allocation2 + $0x18] sm:$0xf] %v817
    %882 = vst [vmem:[#allocation2 + $0x1c] sm:$0xf] %v818
    %883 = vst [vmem:[#allocation2 + $0x20] sm:$0xf] %v819
    %884 = vst [vmem:[#allocation2 + $0x24] sm:$0xf] %v820
    %885 = vst [vmem:[#allocation2 + $0x28] sm:$0xf] %v821
    %886 = vst [vmem:[#allocation2 + $0x2c] sm:$0xf] %v822
    %887 = vst [vmem:[#allocation2 + $0x30] sm:$0xf] %v823
    %888 = vst [vmem:[#allocation2 + $0x34] sm:$0xf] %v824
    %889 = vst [vmem:[#allocation2 + $0x38] sm:$0xf] %v825
    %890 = vst [vmem:[#allocation2 + $0x3c] sm:$0xf] %v826
    %891 = vst [vmem:[#allocation2 + $0x40] sm:$0xf] %v827
    %892 = vst [vmem:[#allocation2 + $0x44] sm:$0xf] %v828
    %893 = vst [vmem:[#allocation2 + $0x48] sm:$0xf] %v829
    %894 = vst [vmem:[#allocation2 + $0x4c] sm:$0xf] %v830
    %895 = vst [vmem:[#allocation2 + $0x50] sm:$0xf] %v831
    %896 = vst [vmem:[#allocation2 + $0x54] sm:$0xf] %v832
    %897 = vst [vmem:[#allocation2 + $0x58] sm:$0xf] %v833
    %898 = vst [vmem:[#allocation2 + $0x5c] sm:$0xf] %v834
    %899 = vst [vmem:[#allocation2 + $0x60] sm:$0xf] %v835
    %900 = vst [vmem:[#allocation2 + $0x64] sm:$0xf] %v836
    %901 = vst [vmem:[#allocation2 + $0x68] sm:$0xf] %v837
    %902 = vst [vmem:[#allocation2 + $0x6c] sm:$0xf] %v838
    %903 = vst [vmem:[#allocation2 + $0x70] sm:$0xf] %v839
    %904 = vst [vmem:[#allocation2 + $0x74] sm:$0xf] %v840
    %905 = vst [vmem:[#allocation2 + $0x78] sm:$0xf] %v841
    %906 = vst [vmem:[#allocation2 + $0x7c] sm:$0xf] %v842
    %v907 = vld [vmem:[%s2] sm:$0xf]
    %v908 = vld [vmem:[%s2 + $0x4] sm:$0xf]
    %v909 = vld [vmem:[%s2 + $0x8] sm:$0xf]
    %v910 = vld [vmem:[%s2 + $0xc] sm:$0xf]
    %v911 = vld [vmem:[%s2 + $0x10] sm:$0xf]
    %v912 = vld [vmem:[%s2 + $0x14] sm:$0xf]
    %v913 = vld [vmem:[%s2 + $0x18] sm:$0xf]
    %v914 = vld [vmem:[%s2 + $0x1c] sm:$0xf]
    %v915 = vld [vmem:[%s2 + $0x20] sm:$0xf]
    %v916 = vld [vmem:[%s2 + $0x24] sm:$0xf]
    %v917 = vld [vmem:[%s2 + $0x28] sm:$0xf]
    %v918 = vld [vmem:[%s2 + $0x2c] sm:$0xf]
    %v919 = vld [vmem:[%s2 + $0x30] sm:$0xf]
    %v920 = vld [vmem:[%s2 + $0x34] sm:$0xf]
    %v921 = vld [vmem:[%s2 + $0x38] sm:$0xf]
    %v922 = vld [vmem:[%s2 + $0x3c] sm:$0xf]
    %v923 = vld [vmem:[%s2 + $0x40] sm:$0xf]
    %v924 = vld [vmem:[%s2 + $0x44] sm:$0xf]
    %v925 = vld [vmem:[%s2 + $0x48] sm:$0xf]
    %v926 = vld [vmem:[%s2 + $0x4c] sm:$0xf]
    %v927 = vld [vmem:[%s2 + $0x50] sm:$0xf]
    %v928 = vld [vmem:[%s2 + $0x54] sm:$0xf]
    %v929 = vld [vmem:[%s2 + $0x58] sm:$0xf]
    %v930 = vld [vmem:[%s2 + $0x5c] sm:$0xf]
    %v931 = vld [vmem:[%s2 + $0x60] sm:$0xf]
    %v932 = vld [vmem:[%s2 + $0x64] sm:$0xf]
    %v933 = vld [vmem:[%s2 + $0x68] sm:$0xf]
    %v934 = vld [vmem:[%s2 + $0x6c] sm:$0xf]
    %v935 = vld [vmem:[%s2 + $0x70] sm:$0xf]
    %v936 = vld [vmem:[%s2 + $0x74] sm:$0xf]
    %v937 = vld [vmem:[%s2 + $0x78] sm:$0xf]
    %v938 = vld [vmem:[%s2 + $0x7c] sm:$0xf]
    %v939 = vunpack.c.l.bf16 %v907
    %v940 = vunpack.c.l.bf16 %v908
    %v941 = vunpack.c.l.bf16 %v909
    %v942 = vunpack.c.l.bf16 %v910
    %v943 = vunpack.c.l.bf16 %v911
    %v944 = vunpack.c.l.bf16 %v912
    %v945 = vunpack.c.l.bf16 %v913
    %v946 = vunpack.c.l.bf16 %v914
    %v947 = vunpack.c.l.bf16 %v915
    %v948 = vunpack.c.l.bf16 %v916
    %v949 = vunpack.c.l.bf16 %v917
    %v950 = vunpack.c.l.bf16 %v918
    %v951 = vunpack.c.l.bf16 %v919
    %v952 = vunpack.c.l.bf16 %v920
    %v953 = vunpack.c.l.bf16 %v921
    %v954 = vunpack.c.l.bf16 %v922
    %v955 = vunpack.c.l.bf16 %v923
    %v956 = vunpack.c.l.bf16 %v924
    %v957 = vunpack.c.l.bf16 %v925
    %v958 = vunpack.c.l.bf16 %v926
    %v959 = vunpack.c.l.bf16 %v927
    %v960 = vunpack.c.l.bf16 %v928
    %v961 = vunpack.c.l.bf16 %v929
    %v962 = vunpack.c.l.bf16 %v930
    %v963 = vunpack.c.l.bf16 %v931
    %v964 = vunpack.c.l.bf16 %v932
    %v965 = vunpack.c.l.bf16 %v933
    %v966 = vunpack.c.l.bf16 %v934
    %v967 = vunpack.c.l.bf16 %v935
    %v968 = vunpack.c.l.bf16 %v936
    %v969 = vunpack.c.l.bf16 %v937
    %v970 = vunpack.c.l.bf16 %v938
    %v971 = vmul.f32 %v715, %v715
    %v972 = vmul.f32 %v716, %v716
    %v973 = vmul.f32 %v717, %v717
    %v974 = vmul.f32 %v718, %v718
    %v975 = vmul.f32 %v719, %v719
    %v976 = vmul.f32 %v720, %v720
    %v977 = vmul.f32 %v721, %v721
    %v978 = vmul.f32 %v722, %v722
    %v979 = vmul.f32 %v723, %v723
    %v980 = vmul.f32 %v724, %v724
    %v981 = vmul.f32 %v725, %v725
    %v982 = vmul.f32 %v726, %v726
    %v983 = vmul.f32 %v727, %v727
    %v984 = vmul.f32 %v728, %v728
    %v985 = vmul.f32 %v729, %v729
    %v986 = vmul.f32 %v730, %v730
    %v987 = vmul.f32 %v731, %v731
    %v988 = vmul.f32 %v732, %v732
    %v989 = vmul.f32 %v733, %v733
    %v990 = vmul.f32 %v734, %v734
    %v991 = vmul.f32 %v735, %v735
    %v992 = vmul.f32 %v736, %v736
    %v993 = vmul.f32 %v737, %v737
    %v994 = vmul.f32 %v738, %v738
    %v995 = vmul.f32 %v739, %v739
    %v996 = vmul.f32 %v740, %v740
    %v997 = vmul.f32 %v741, %v741
    %v998 = vmul.f32 %v742, %v742
    %v999 = vmul.f32 %v743, %v743
    %v1000 = vmul.f32 %v744, %v744
    %v1001 = vmul.f32 %v745, %v745
    %v1002 = vmul.f32 %v746, %v746
    %v1003 = vld [vmem:[#allocation4] sm:$0x77]
    %1004 = vxpose.xlu0.b32.start [1/16] %v939, 128
    %1005 = vxpose.xlu0.b32.cont [2/16] %v940, 128
    %1006 = vxpose.xlu0.b32.cont [3/16] %v941, 128
    %1007 = vxpose.xlu0.b32.cont [4/16] %v942, 128
    %1008 = vxpose.xlu0.b32.cont [5/16] %v943, 128
    %1009 = vxpose.xlu0.b32.cont [6/16] %v944, 128
    %1010 = vxpose.xlu0.b32.cont [7/16] %v945, 128
    %1011 = vxpose.xlu0.b32.cont [8/16] %v946, 128
    %1012 = vxpose.xlu0.b32.cont [9/16] %v947, 128
    %1013 = vxpose.xlu0.b32.cont [10/16] %v948, 128
    %1014 = vxpose.xlu0.b32.cont [11/16] %v949, 128
    %1015 = vxpose.xlu0.b32.cont [12/16] %v950, 128
    %1016 = vxpose.xlu0.b32.cont [13/16] %v951, 128
    %1017 = vxpose.xlu0.b32.cont [14/16] %v952, 128
    %1018 = vxpose.xlu0.b32.cont [15/16] %v953, 128
    %1019 = vxpose.xlu0.b32.end [16/16] %v954, 128
    %v1020 = vpop.trf.xlu0
    %v1021 = vpop.trf.xlu0
    %v1022 = vpop.trf.xlu0
    %v1023 = vpop.trf.xlu0
    %v1024 = vpop.trf.xlu0
    %v1025 = vpop.trf.xlu0
    %v1026 = vpop.trf.xlu0
    %v1027 = vpop.trf.xlu0
    %v1028 = vpop.trf.xlu0
    %v1029 = vpop.trf.xlu0
    %v1030 = vpop.trf.xlu0
    %v1031 = vpop.trf.xlu0
    %v1032 = vpop.trf.xlu0
    %v1033 = vpop.trf.xlu0
    %v1034 = vpop.trf.xlu0
    %v1035 = vpop.trf.xlu0
    %1036 = vxpose.xlu0.b32.start [1/16] %v955, 128
    %1037 = vxpose.xlu0.b32.cont [2/16] %v956, 128
    %1038 = vxpose.xlu0.b32.cont [3/16] %v957, 128
    %1039 = vxpose.xlu0.b32.cont [4/16] %v958, 128
    %1040 = vxpose.xlu0.b32.cont [5/16] %v959, 128
    %1041 = vxpose.xlu0.b32.cont [6/16] %v960, 128
    %1042 = vxpose.xlu0.b32.cont [7/16] %v961, 128
    %1043 = vxpose.xlu0.b32.cont [8/16] %v962, 128
    %1044 = vxpose.xlu0.b32.cont [9/16] %v963, 128
    %1045 = vxpose.xlu0.b32.cont [10/16] %v964, 128
    %1046 = vxpose.xlu0.b32.cont [11/16] %v965, 128
    %1047 = vxpose.xlu0.b32.cont [12/16] %v966, 128
    %1048 = vxpose.xlu0.b32.cont [13/16] %v967, 128
    %1049 = vxpose.xlu0.b32.cont [14/16] %v968, 128
    %1050 = vxpose.xlu0.b32.cont [15/16] %v969, 128
    %1051 = vxpose.xlu0.b32.end [16/16] %v970, 128
    %v1052 = vpop.trf.xlu0
    %v1053 = vpop.trf.xlu0
    %v1054 = vpop.trf.xlu0
    %v1055 = vpop.trf.xlu0
    %v1056 = vpop.trf.xlu0
    %v1057 = vpop.trf.xlu0
    %v1058 = vpop.trf.xlu0
    %v1059 = vpop.trf.xlu0
    %v1060 = vpop.trf.xlu0
    %v1061 = vpop.trf.xlu0
    %v1062 = vpop.trf.xlu0
    %v1063 = vpop.trf.xlu0
    %v1064 = vpop.trf.xlu0
    %v1065 = vpop.trf.xlu0
    %v1066 = vpop.trf.xlu0
    %v1067 = vpop.trf.xlu0
    %1068 = vmatprep.subr.mxu0 %v971
    %1069 = vmatpush1.msra.mxu0 %v715
    %1070 = vmatprep.subr.mxu0 %v972
    %1071 = vmatpush1.msra.mxu0 %v716
    %1072 = vmatprep.subr.mxu0 %v973
    %1073 = vmatpush1.msra.mxu0 %v717
    %1074 = vmatprep.subr.mxu0 %v974
    %1075 = vmatpush1.msra.mxu0 %v718
    %1076 = vmatprep.subr.mxu0 %v975
    %1077 = vmatpush1.msra.mxu0 %v719
    %1078 = vmatprep.subr.mxu0 %v976
    %1079 = vmatpush1.msra.mxu0 %v720
    %1080 = vmatprep.subr.mxu0 %v977
    %1081 = vmatpush1.msra.mxu0 %v721
    %1082 = vmatprep.subr.mxu0 %v978
    %1083 = vmatpush1.msra.mxu0 %v722
    %1084 = vmatprep.subr.mxu0 %v979
    %1085 = vmatpush1.msra.mxu0 %v723
    %1086 = vmatprep.subr.mxu0 %v980
    %1087 = vmatpush1.msra.mxu0 %v724
    %1088 = vmatprep.subr.mxu0 %v981
    %1089 = vmatpush1.msra.mxu0 %v725
    %1090 = vmatprep.subr.mxu0 %v982
    %1091 = vmatpush1.msra.mxu0 %v726
    %1092 = vmatprep.subr.mxu0 %v983
    %1093 = vmatpush1.msra.mxu0 %v727
    %1094 = vmatprep.subr.mxu0 %v984
    %1095 = vmatpush1.msra.mxu0 %v728
    %1096 = vmatprep.subr.mxu0 %v985
    %1097 = vmatpush1.msra.mxu0 %v729
    %1098 = vmatprep.subr.mxu0 %v986
    %1099 = vmatpush1.msra.mxu0 %v730
    %1100 = vmatprep.subr.mxu0 %v987
    %1101 = vmatpush1.msra.mxu0 %v731
    %1102 = vmatprep.subr.mxu0 %v988
    %1103 = vmatpush1.msra.mxu0 %v732
    %1104 = vmatprep.subr.mxu0 %v989
    %1105 = vmatpush1.msra.mxu0 %v733
    %1106 = vmatprep.subr.mxu0 %v990
    %1107 = vmatpush1.msra.mxu0 %v734
    %1108 = vmatprep.subr.mxu0 %v991
    %1109 = vmatpush1.msra.mxu0 %v735
    %1110 = vmatprep.subr.mxu0 %v992
    %1111 = vmatpush1.msra.mxu0 %v736
    %1112 = vmatprep.subr.mxu0 %v993
    %1113 = vmatpush1.msra.mxu0 %v737
    %1114 = vmatprep.subr.mxu0 %v994
    %1115 = vmatpush1.msra.mxu0 %v738
    %1116 = vmatprep.subr.mxu0 %v995
    %1117 = vmatpush1.msra.mxu0 %v739
    %1118 = vmatprep.subr.mxu0 %v996
    %1119 = vmatpush1.msra.mxu0 %v740
    %1120 = vmatprep.subr.mxu0 %v997
    %1121 = vmatpush1.msra.mxu0 %v741
    %1122 = vmatprep.subr.mxu0 %v998
    %1123 = vmatpush1.msra.mxu0 %v742
    %1124 = vmatprep.subr.mxu0 %v999
    %1125 = vmatpush1.msra.mxu0 %v743
    %1126 = vmatprep.subr.mxu0 %v1000
    %1127 = vmatpush1.msra.mxu0 %v744
    %1128 = vmatprep.subr.mxu0 %v1001
    %1129 = vmatpush1.msra.mxu0 %v745
    %1130 = vmatprep.subr.mxu0 %v1002
    %1131 = vmatpush1.msra.mxu0 %v746
    %1132 = vmatprep.mubr.f32.mxu0 %v1052
    %1133 = vmatmul.mubr.f32.gmra.mrb[0].mxu0 %v1020
    %v1134 = vpop.f32.mrb[0].mxu0
    %v1135 = vadd.f32 0.0, %v1134
    %v1136 = vpop.f32.mrb[0].mxu0
    %v1137 = vadd.f32 0.0, %v1136
    %1138 = vdwg.mxu0
    %v1141 = vcombine.low %v1135, %v1137
    %v1143 = vadd.f32 %v1003, %v1141
    %1144 = vst [vmem:[#allocation4] sm:$0x77] %v1143
    // Predicated region
    $region30: #{tpu_custom_call.1} parent=1 // pred_check
      _
    $region31: #{tpu_custom_call.1} parent=1 // pred_check_branch
      %1146 = sbr.rel (0) target = $region33
    $region32: #{tpu_custom_call.1} parent=1 // pred_region
      %s1148 = ssub.s32 2048, 2048
      %1149 = vsyncadd [#allocation3], %s1148
      %s1150 = sshll.u32 [#allocation2], 4
      %s1151 = int_to_ptr.vmem [resolvable:$true] %s1150
      %1156 = dma.vmem_to_hbm [thread:$0]  %s1151, 2048, %s6, [#allocation3], 64, 64, 4
    $region33: #{tpu_custom_call.1} parent=1 // pred_fallthru
      _
    // Predicated region
    $region34: #{tpu_custom_call.1} parent=1 // pred_check
      _
    $region35: #{tpu_custom_call.1} parent=1 // pred_check_branch
      %1158 = sbr.rel (0) target = $region37
    $region36: #{tpu_custom_call.1} parent=1 // pred_region
      %s1160 = ssub.s32 128, 128
      %1161 = vsyncadd [#allocation5], %s1160
      %s1163 = sshll.u32 [#allocation4], 4
      %s1164 = int_to_ptr.vmem [resolvable:$true] %s1163
      %1166 = dma.vmem_to_hbm [thread:$0]  %s1164, 128, %s7, [#allocation5]
    $region37: #{tpu_custom_call.1} parent=1 // pred_fallthru
      _
    // Predicated region
    $region38: #{tpu_custom_call.1} parent=1 // pred_check
      _
    $region39: #{tpu_custom_call.1} parent=1 // pred_check_branch
      %1168 = sbr.rel (0) target = $region41
    $region40: #{tpu_custom_call.1} parent=1 // pred_region
      %1169 = dma.done [#allocation3], 2048
    $region41: #{tpu_custom_call.1} parent=1 // pred_fallthru
      _
    // Predicated region
    $region42: #{tpu_custom_call.1} parent=1 // pred_check
      _
    $region43: #{tpu_custom_call.1} parent=1 // pred_check_branch
      %1171 = sbr.rel (0) target = $region45
    $region44: #{tpu_custom_call.1} parent=1 // pred_region
      %1172 = dma.done [#allocation5], 128
    $region45: #{tpu_custom_call.1} parent=1 // pred_fallthru
      _
    %1173 = vsyncpa [#allocation3], 1
    %1174 = vsyncpa [#allocation5], 1

</llo_original>
